<compile_context>
chip_gen: v7x
topology: tpu7x:2x2x1
jax: 0.10.0
libtpu: 0.0.40
codegen_flags: <defaults>
</compile_context>

<pallas_src>
from functools import partial

import jax
import jax.numpy as jnp
import numpy as np
from jax.experimental import pallas as pl
from jax.experimental.pallas import tpu as pltpu

# channel widths (reduced-width analogue of ResNetV2 / UNet_idea)
C1, C2, C3, C4 = 8, 16, 32, 64           # backbone skip / feature channels
D1, D2, D3, D4 = 32, 16, 8, 4            # decoder output channels
NUM_CLASSES = 9

_VMEM_LIMIT = 32 * 1024 * 1024           # explicit, well under v7x's 64 MiB


def _round_up(x, m):
    return (x + m - 1) // m * m


def _pick_tile(s):
    for ts in (512, 256, 128):
        if s % ts == 0:
            return ts
    return s                              # full-extent block for small / odd S


# =============================================================================
# Kernel 1: fused 3x3 conv  (in-kernel im2col + GEMM + bias + ReLU)
# =============================================================================
def _conv3x3_kernel(x_ref, w_ref, b_ref, o_ref, *, wf, relu):
    """One image per grid step (grid axis is 'parallel').

    x_ref: (1, Cin, Sin)  bf16  spatially padded image, row-major flattened,
                                with >= 2*wf+2 zero tail lanes
    w_ref: (Cout, 9*Cin)  bf16  taps ordered (kh, kw, cin)
    b_ref: (Cout, 1)      f32
    o_ref: (1, Cout, Sf)  bf16  conv outputs on the padded Hf x Wf grid
                                (valid region [:H, :W]; rest is discarded)
    """
    cin = x_ref.shape[1]
    so = o_ref.shape[2]
    x = x_ref[0]                                        # (Cin, Sin)
    acc = None
    for t in range(9):                                  # unrolled at trace time
        kh, kw = divmod(t, 3)
        off = kh * wf + kw                              # static lane offset
        xs = x[:, off:off + so]                         # shifted view (Cin, Sf)
        wt = w_ref[:, t * cin:(t + 1) * cin]            # (Cout, Cin)
        d = jnp.dot(wt, xs, preferred_element_type=jnp.float32)
        acc = d if acc is None else acc + d
    acc = acc + b_ref[...]
    if relu:
        acc = jnp.maximum(acc, 0.0)
    o_ref[0] = acc.astype(o_ref.dtype)


def conv3x3(x, p, *, stride=1, relu=True):
    """3x3 conv, padding=1, stride in {1,2}.  x: (N, Cin, H, W) bf16."""
    w, b = p["w"], p["b"]
    n, cin, h, wdt = x.shape
    cout = w.shape[0]
    hf, wf = h + 2, wdt + 2
    sf = hf * wf
    sin = _round_up(sf + 2 * wf + 2, 128)               # halo tail, lane-aligned

    xp = jnp.pad(x, ((0, 0), (0, 0), (1, 1), (1, 1))).reshape(n, cin, sf)
    xp = jnp.pad(xp, ((0, 0), (0, 0), (0, sin - sf)))

    out = pl.pallas_call(
        partial(_conv3x3_kernel, wf=wf, relu=relu),
        out_shape=jax.ShapeDtypeStruct((n, cout, sf), jnp.bfloat16),
        grid=(n,),
        in_specs=[
            pl.BlockSpec((1, cin, sin), lambda i: (i, 0, 0)),
            pl.BlockSpec((cout, 9 * cin), lambda i: (0, 0)),
            pl.BlockSpec((cout, 1), lambda i: (0, 0)),
        ],
        out_specs=pl.BlockSpec((1, cout, sf), lambda i: (i, 0, 0)),
        compiler_params=pltpu.CompilerParams(
            dimension_semantics=("parallel",), vmem_limit_bytes=_VMEM_LIMIT),
    )(xp, w, b)

    out = out.reshape(n, cout, hf, wf)
    # keep the valid top-left H x W region; stride-2 convs subsample it
    return out[:, :, :h:stride, :wdt:stride]


# =============================================================================
# Kernel 2: fused dual 1x1 heads + residual add  (ans = head(d) + predict(u))
# =============================================================================
def _dual_head_kernel(d_ref, u_ref, w1_ref, b1_ref, w2_ref, b2_ref, o_ref):
    acc = jnp.dot(w1_ref[...], d_ref[0], preferred_element_type=jnp.float32)
    acc = acc + jnp.dot(w2_ref[...], u_ref[0], preferred_element_type=jnp.float32)
    acc = acc + b1_ref[...] + b2_ref[...]
    o_ref[0] = acc


def dual_head(d, u, p_head, p_pred):
    n, c, h, w = d.shape
    s = h * w
    ts = _pick_tile(s)
    nc = p_head["w"].shape[0]
    d2 = d.reshape(n, c, s)
    u2 = u.reshape(n, c, s)
    out = pl.pallas_call(
        _dual_head_kernel,
        out_shape=jax.ShapeDtypeStruct((n, nc, s), jnp.float32),
        grid=(n, s // ts),
        in_specs=[
            pl.BlockSpec((1, c, ts), lambda i, j: (i, 0, j)),
            pl.BlockSpec((1, c, ts), lambda i, j: (i, 0, j)),
            pl.BlockSpec((nc, c), lambda i, j: (0, 0)),
            pl.BlockSpec((nc, 1), lambda i, j: (0, 0)),
            pl.BlockSpec((nc, c), lambda i, j: (0, 0)),
            pl.BlockSpec((nc, 1), lambda i, j: (0, 0)),
        ],
        out_specs=pl.BlockSpec((1, nc, ts), lambda i, j: (i, 0, j)),
        compiler_params=pltpu.CompilerParams(
            dimension_semantics=("parallel", "parallel"),
            vmem_limit_bytes=_VMEM_LIMIT),
    )(d2, u2, p_head["w"], p_head["b"], p_pred["w"], p_pred["b"])
    return out.reshape(n, nc, h, w)


# =============================================================================
# Parameters (deterministic synthetic init, stored in kernel-native layout)
# =============================================================================
def _conv_init(key, cout, cin, k):
    fan_in = k * k * cin
    w = jax.random.normal(key, (cout, k, k, cin), jnp.float32) * (2.0 / fan_in) ** 0.5
    return {"w": w.reshape(cout, k * k * cin).astype(jnp.bfloat16),
            "b": jnp.zeros((cout, 1), jnp.float32)}


def make_params(key):
    spec = {
        # backbone (ResNetV2-like, strided convs)
        "bb1": (C1, 3, 3), "bb2": (C2, C1, 3), "bb3": (C3, C2, 3), "bb4": (C4, C3, 3),
        # decoder (UNet_idea-like)
        "dec1a": (D1, C4 + C3, 3), "dec1b": (D1, D1, 3),
        "dec2a": (D2, D1 + C2, 3), "dec2b": (D2, D2, 3),
        "dec3a": (D3, D2 + C1, 3), "dec3b": (D3, D3, 3),
        "dec4a": (D4, D3, 3),      "dec4b": (D4, D4, 3),
        "dec_head": (NUM_CLASSES, D4, 1),
        # self.up (Up(64, 16, 0) analogue)
        "up_a": (D4, D3, 3), "up_b": (D4, D4, 3),
        # self.predict (OutConv(16, num_classes) analogue)
        "predict": (NUM_CLASSES, D4, 1),
    }
    params = {}
    for i, (name, (cout, cin, k)) in enumerate(sorted(spec.items())):
        params[name] = _conv_init(jax.random.fold_in(key, i), cout, cin, k)
    return params


# =============================================================================
# Student_Net forward
# =============================================================================
def upsample2x(x):
    n, c, h, w = x.shape
    # TODO(synk): interpolate mode of Up/UNet_idea unspecified; bilinear assumed.
    return jax.image.resize(x, (n, c, 2 * h, 2 * w), method="bilinear")


def student_net_forward(params, x_nchw):
    x = x_nchw
    if x.shape[1] == 1:                                  # x = x.repeat(1, 3, 1, 1)
        x = jnp.tile(x, (1, 3, 1, 1))
    x = x.astype(jnp.bfloat16)

    # ---- backbone: feature, mid = self.backbone(x) ----
    s1 = conv3x3(x,  params["bb1"], stride=2)            # 1/2 , C1
    s2 = conv3x3(s1, params["bb2"], stride=2)            # 1/4 , C2
    s3 = conv3x3(s2, params["bb3"], stride=2)            # 1/8 , C3
    feature = conv3x3(s3, params["bb4"], stride=2)       # 1/16, C4

    # ---- decoder: ans, tmp = self.decoder(feature, mid) ----
    d = jnp.concatenate([upsample2x(feature), s3], axis=1)
    d = conv3x3(conv3x3(d, params["dec1a"]), params["dec1b"])      # 1/8 , D1
    d = jnp.concatenate([upsample2x(d), s2], axis=1)
    d = conv3x3(conv3x3(d, params["dec2a"]), params["dec2b"])      # 1/4 , D2
    d = jnp.concatenate([upsample2x(d), s1], axis=1)
    tmp = conv3x3(conv3x3(d, params["dec3a"]), params["dec3b"])    # 1/2 , D3
    d = upsample2x(tmp)
    d = conv3x3(conv3x3(d, params["dec4a"]), params["dec4b"])      # 1/1 , D4

    # ---- tmp = self.up(tmp) ----
    u = upsample2x(tmp)
    u = conv3x3(conv3x3(u, params["up_a"]), params["up_b"])        # 1/1 , D4

    # ---- ans = dec_head(d) + predict(u)  (fused heads + residual add) ----
    ans = dual_head(d, u, params["dec_head"], params["predict"])   # f32, NCHW
    return ans, 1


# =============================================================================
# Pure-JAX references (used only for the small self-checks in __main__)
# =============================================================================
def _reference_conv3x3(x, p, *, stride):
    n, cin, h, w = x.shape
    cout = p["w"].shape[0]
    xf = x.astype(jnp.float32)
    w_hwio = p["w"].astype(jnp.float32).reshape(cout, 3, 3, cin).transpose(1, 2, 3, 0)
    y = jax.lax.conv_general_dilated(
        xf, w_hwio, window_strides=(stride, stride), padding=((1, 1), (1, 1)),
        dimension_numbers=("NCHW", "HWIO", "NCHW"))
    y = y + p["b"].astype(jnp.float32).reshape(1, cout, 1, 1)
    return jnp.maximum(y, 0.0)


def _reference_dual_head(d, u, p_head, p_pred):
    n, c, h, w = d.shape
    df = d.astype(jnp.float32).reshape(n, c, -1)
    uf = u.astype(jnp.float32).reshape(n, c, -1)
    y = (jnp.einsum("oc,ncs->nos", p_head["w"].astype(jnp.float32), df)
         + p_head["b"][None]
         + jnp.einsum("oc,ncs->nos", p_pred["w"].astype(jnp.float32), uf)
         + p_pred["b"][None])
    return y.reshape(n, -1, h, w)


# =============================================================================
if __name__ == "__main__":
    key = jax.random.PRNGKey(0)
    pkey, xkey, tkey = jax.random.split(key, 3)

    # ---- tiny correctness checks of both kernels against pure-JAX refs ----
    ck = jax.random.split(tkey, 4)
    xc = jax.random.normal(ck[0], (2, 5, 8, 8), jnp.float32).astype(jnp.bfloat16)
    pc = _conv_init(ck[1], 8, 5, 3)
    for s in (1, 2):
        got = conv3x3(xc, pc, stride=s, relu=True).astype(jnp.float32)
        ref = _reference_conv3x3(xc, pc, stride=s)
        np.testing.assert_allclose(np.asarray(got), np.asarray(ref),
                                   rtol=3e-2, atol=3e-2)

    dh_d = jax.random.normal(ck[2], (2, D4, 8, 8), jnp.float32).astype(jnp.bfloat16)
    dh_u = jax.random.normal(ck[3], (2, D4, 8, 8), jnp.float32).astype(jnp.bfloat16)
    ph = _conv_init(jax.random.fold_in(tkey, 7), NUM_CLASSES, D4, 1)
    pp = _conv_init(jax.random.fold_in(tkey, 8), NUM_CLASSES, D4, 1)
    got = dual_head(dh_d, dh_u, ph, pp)
    ref = _reference_dual_head(dh_d, dh_u, ph, pp)
    np.testing.assert_allclose(np.asarray(got), np.asarray(ref),
                               rtol=2e-2, atol=2e-2)

    # ---- full forward (NCHW input with one channel exercises the repeat) ----
    params = make_params(pkey)
    x = jax.random.normal(xkey, (2, 1, 32, 32), jnp.float32)

    fwd = jax.jit(student_net_forward)
    ans, flag = fwd(params, x)
    ans = jax.block_until_ready(ans)

    assert ans.shape == (2, NUM_CLASSES, 32, 32), ans.shape
    assert ans.dtype == jnp.float32
    assert flag == 1
    assert bool(jnp.all(jnp.isfinite(ans)))
    print("KERNEL_OK")
</pallas_src>

<mosaic_0001>
module attributes {stable_mosaic.version = 11 : i64} {
  func.func @_conv3x3_kernel(%arg0: i32, %arg1: memref<1x5x128xbf16, #tpu.memory_space<vmem>>, %arg2: memref<8x45xbf16, #tpu.memory_space<vmem>>, %arg3: memref<8x1xf32, #tpu.memory_space<vmem>>, %arg4: memref<1x8x100xbf16, #tpu.memory_space<vmem>>) attributes {dimension_semantics = [#tpu.dimension_semantics<parallel>], iteration_bounds = array<i64: 2>, scalar_prefetch = 0 : i64, scratch_operands = 0 : i64, tpu.core_type = #tpu.core_type<tc>, window_params = [{transform_indices = @transform_0, window_bounds = array<i64: 1, 5, 128>}, {pipeline_mode = #tpu.pipeline_mode<synchronous>, transform_indices = @transform_1, window_bounds = array<i64: 8, 45>}, {pipeline_mode = #tpu.pipeline_mode<synchronous>, transform_indices = @transform_2, window_bounds = array<i64: 8, 1>}, {transform_indices = @transform_3, window_bounds = array<i64: 1, 8, 100>}]} {
    %c0 = arith.constant 0 : index
    %c0_0 = arith.constant 0 : index
    %c0_1 = arith.constant 0 : index
    %0 = vector.load %arg1[%c0, %c0_0, %c0_1] : memref<1x5x128xbf16, #tpu.memory_space<vmem>>, vector<1x5x128xbf16>
    %1 = vector.shape_cast %0 : vector<1x5x128xbf16> to vector<5x128xbf16>
    %2 = vector.extract_strided_slice %1 {offsets = [0, 0], sizes = [5, 100], strides = [1, 1]} : vector<5x128xbf16> to vector<5x100xbf16>
    %c0_2 = arith.constant 0 : index
    %c0_3 = arith.constant 0 : index
    %3 = vector.load %arg2[%c0_2, %c0_3] : memref<8x45xbf16, #tpu.memory_space<vmem>>, vector<8x5xbf16>
    %cst = arith.constant dense<0.000000e+00> : vector<8x100xf32>
    %4 = tpu.matmul %3, %2, %cst {dimension_numbers = #tpu.dot_dimension_numbers<[1], [0], [0], [1], [0, 0, 1, 1], [], []>} : vector<8x5xbf16>, vector<5x100xbf16>, vector<8x100xf32> -> vector<8x100xf32>
    %5 = vector.extract_strided_slice %1 {offsets = [0, 1], sizes = [5, 100], strides = [1, 1]} : vector<5x128xbf16> to vector<5x100xbf16>
    %c0_4 = arith.constant 0 : index
    %c5 = arith.constant 5 : index
    %6 = vector.load %arg2[%c0_4, %c5] : memref<8x45xbf16, #tpu.memory_space<vmem>>, vector<8x5xbf16>
    %cst_5 = arith.constant dense<0.000000e+00> : vector<8x100xf32>
    %7 = tpu.matmul %6, %5, %cst_5 {dimension_numbers = #tpu.dot_dimension_numbers<[1], [0], [0], [1], [0, 0, 1, 1], [], []>} : vector<8x5xbf16>, vector<5x100xbf16>, vector<8x100xf32> -> vector<8x100xf32>
    %8 = arith.addf %4, %7 : vector<8x100xf32>
    %9 = vector.extract_strided_slice %1 {offsets = [0, 2], sizes = [5, 100], strides = [1, 1]} : vector<5x128xbf16> to vector<5x100xbf16>
    %c0_6 = arith.constant 0 : index
    %c10 = arith.constant 10 : index
    %10 = vector.load %arg2[%c0_6, %c10] : memref<8x45xbf16, #tpu.memory_space<vmem>>, vector<8x5xbf16>
    %cst_7 = arith.constant dense<0.000000e+00> : vector<8x100xf32>
    %11 = tpu.matmul %10, %9, %cst_7 {dimension_numbers = #tpu.dot_dimension_numbers<[1], [0], [0], [1], [0, 0, 1, 1], [], []>} : vector<8x5xbf16>, vector<5x100xbf16>, vector<8x100xf32> -> vector<8x100xf32>
    %12 = arith.addf %8, %11 : vector<8x100xf32>
    %13 = vector.extract_strided_slice %1 {offsets = [0, 10], sizes = [5, 100], strides = [1, 1]} : vector<5x128xbf16> to vector<5x100xbf16>
    %c0_8 = arith.constant 0 : index
    %c15 = arith.constant 15 : index
    %14 = vector.load %arg2[%c0_8, %c15] : memref<8x45xbf16, #tpu.memory_space<vmem>>, vector<8x5xbf16>
    %cst_9 = arith.constant dense<0.000000e+00> : vector<8x100xf32>
    %15 = tpu.matmul %14, %13, %cst_9 {dimension_numbers = #tpu.dot_dimension_numbers<[1], [0], [0], [1], [0, 0, 1, 1], [], []>} : vector<8x5xbf16>, vector<5x100xbf16>, vector<8x100xf32> -> vector<8x100xf32>
    %16 = arith.addf %12, %15 : vector<8x100xf32>
    %17 = vector.extract_strided_slice %1 {offsets = [0, 11], sizes = [5, 100], strides = [1, 1]} : vector<5x128xbf16> to vector<5x100xbf16>
    %c0_10 = arith.constant 0 : index
    %c20 = arith.constant 20 : index
    %18 = vector.load %arg2[%c0_10, %c20] : memref<8x45xbf16, #tpu.memory_space<vmem>>, vector<8x5xbf16>
    %cst_11 = arith.constant dense<0.000000e+00> : vector<8x100xf32>
    %19 = tpu.matmul %18, %17, %cst_11 {dimension_numbers = #tpu.dot_dimension_numbers<[1], [0], [0], [1], [0, 0, 1, 1], [], []>} : vector<8x5xbf16>, vector<5x100xbf16>, vector<8x100xf32> -> vector<8x100xf32>
    %20 = arith.addf %16, %19 : vector<8x100xf32>
    %21 = vector.extract_strided_slice %1 {offsets = [0, 12], sizes = [5, 100], strides = [1, 1]} : vector<5x128xbf16> to vector<5x100xbf16>
    %c0_12 = arith.constant 0 : index
    %c25 = arith.constant 25 : index
    %22 = vector.load %arg2[%c0_12, %c25] : memref<8x45xbf16, #tpu.memory_space<vmem>>, vector<8x5xbf16>
    %cst_13 = arith.constant dense<0.000000e+00> : vector<8x100xf32>
    %23 = tpu.matmul %22, %21, %cst_13 {dimension_numbers = #tpu.dot_dimension_numbers<[1], [0], [0], [1], [0, 0, 1, 1], [], []>} : vector<8x5xbf16>, vector<5x100xbf16>, vector<8x100xf32> -> vector<8x100xf32>
    %24 = arith.addf %20, %23 : vector<8x100xf32>
    %25 = vector.extract_strided_slice %1 {offsets = [0, 20], sizes = [5, 100], strides = [1, 1]} : vector<5x128xbf16> to vector<5x100xbf16>
    %c0_14 = arith.constant 0 : index
    %c30 = arith.constant 30 : index
    %26 = vector.load %arg2[%c0_14, %c30] : memref<8x45xbf16, #tpu.memory_space<vmem>>, vector<8x5xbf16>
    %cst_15 = arith.constant dense<0.000000e+00> : vector<8x100xf32>
    %27 = tpu.matmul %26, %25, %cst_15 {dimension_numbers = #tpu.dot_dimension_numbers<[1], [0], [0], [1], [0, 0, 1, 1], [], []>} : vector<8x5xbf16>, vector<5x100xbf16>, vector<8x100xf32> -> vector<8x100xf32>
    %28 = arith.addf %24, %27 : vector<8x100xf32>
    %29 = vector.extract_strided_slice %1 {offsets = [0, 21], sizes = [5, 100], strides = [1, 1]} : vector<5x128xbf16> to vector<5x100xbf16>
    %c0_16 = arith.constant 0 : index
    %c35 = arith.constant 35 : index
    %30 = vector.load %arg2[%c0_16, %c35] : memref<8x45xbf16, #tpu.memory_space<vmem>>, vector<8x5xbf16>
    %cst_17 = arith.constant dense<0.000000e+00> : vector<8x100xf32>
    %31 = tpu.matmul %30, %29, %cst_17 {dimension_numbers = #tpu.dot_dimension_numbers<[1], [0], [0], [1], [0, 0, 1, 1], [], []>} : vector<8x5xbf16>, vector<5x100xbf16>, vector<8x100xf32> -> vector<8x100xf32>
    %32 = arith.addf %28, %31 : vector<8x100xf32>
    %33 = vector.extract_strided_slice %1 {offsets = [0, 22], sizes = [5, 100], strides = [1, 1]} : vector<5x128xbf16> to vector<5x100xbf16>
    %c0_18 = arith.constant 0 : index
    %c40 = arith.constant 40 : index
    %34 = vector.load %arg2[%c0_18, %c40] : memref<8x45xbf16, #tpu.memory_space<vmem>>, vector<8x5xbf16>
    %cst_19 = arith.constant dense<0.000000e+00> : vector<8x100xf32>
    %35 = tpu.matmul %34, %33, %cst_19 {dimension_numbers = #tpu.dot_dimension_numbers<[1], [0], [0], [1], [0, 0, 1, 1], [], []>} : vector<8x5xbf16>, vector<5x100xbf16>, vector<8x100xf32> -> vector<8x100xf32>
    %36 = arith.addf %32, %35 : vector<8x100xf32>
    %c0_20 = arith.constant 0 : index
    %c0_21 = arith.constant 0 : index
    %37 = vector.load %arg3[%c0_20, %c0_21] : memref<8x1xf32, #tpu.memory_space<vmem>>, vector<8x1xf32>
    %38 = vector.broadcast %37 : vector<8x1xf32> to vector<8x100xf32>
    %39 = arith.addf %36, %38 : vector<8x100xf32>
    %cst_22 = arith.constant 0.000000e+00 : f32
    %40 = vector.broadcast %cst_22 : f32 to vector<8x100xf32>
    %41 = arith.maximumf %39, %40 : vector<8x100xf32>
    %42 = arith.truncf %41 : vector<8x100xf32> to vector<8x100xbf16>
    %c0_23 = arith.constant 0 : index
    %c0_24 = arith.constant 0 : index
    %c0_25 = arith.constant 0 : index
    %43 = vector.load %arg4[%c0_23, %c0_24, %c0_25] : memref<1x8x100xbf16, #tpu.memory_space<vmem>>, vector<1x8x100xbf16>
    %44 = vector.shape_cast %43 : vector<1x8x100xbf16> to vector<8x100xbf16>
    %45 = vector.shape_cast %42 : vector<8x100xbf16> to vector<1x8x100xbf16>
    tpu.vector_store %arg4[%c0_23, %c0_24, %c0_25], %45 {strides = array<i32>} : memref<1x8x100xbf16, #tpu.memory_space<vmem>>, vector<1x8x100xbf16>,
    return
  }
  func.func @transform_0(%arg0: i32) -> (i32, i32, i32) {
    %c0_i32 = arith.constant 0 : i32
    %c0_i32_0 = arith.constant 0 : i32
    %c0_i32_1 = arith.constant 0 : i32
    return %arg0, %c0_i32, %c0_i32_0 : i32, i32, i32
  }
  func.func @transform_1(%arg0: i32) -> (i32, i32) {
    %c0_i32 = arith.constant 0 : i32
    %c0_i32_0 = arith.constant 0 : i32
    %c0_i32_1 = arith.constant 0 : i32
    return %c0_i32, %c0_i32_0 : i32, i32
  }
  func.func @transform_2(%arg0: i32) -> (i32, i32) {
    %c0_i32 = arith.constant 0 : i32
    %c0_i32_0 = arith.constant 0 : i32
    %c0_i32_1 = arith.constant 0 : i32
    return %c0_i32, %c0_i32_0 : i32, i32
  }
  func.func @transform_3(%arg0: i32) -> (i32, i32, i32) {
    %c0_i32 = arith.constant 0 : i32
    %c0_i32_0 = arith.constant 0 : i32
    %c0_i32_1 = arith.constant 0 : i32
    return %arg0, %c0_i32, %c0_i32_0 : i32, i32, i32
  }
}

</mosaic_0001>

<llo_original>
// kernel: tpu_custom_call.1
$region0: #{tpu_custom_call.1}
  #allocation0 [shape = 'u32[]', space=smem, size = 0x4, offset = 0x4, fixed_abs, tag = 'smem constant byte address 0x4 - core index']
  #allocation1 [shape = 'u32[144,128]{1,0:T(1,128)}', space=vmem, size = 0x12000, scoped, tag = 'internal scratch']
  %s0 = inlined_call_operand.vmem [shape: bf16[2,5,128], index: 0, kind: input, shape index: {}]
  %s1 = inlined_call_operand.vmem [shape: bf16[8,45], index: 1, kind: input, shape index: {}]
  %s2 = inlined_call_operand.vmem [shape: f32[8,1], index: 2, kind: input, shape index: {}]
  %s3 = inlined_call_operand.hbm [shape: bf16[2,8,100], index: 3, kind: output, shape index: {}]
  %s4 = sld [smem:[#allocation0]]
  $region45: #{tpu_custom_call.1} parent=0
    _
  %s6 = ssub.s32 1, %s4
  %s7 = scalar_select 0, %s6, %s4
  $region1: #{tpu_custom_call.1} parent=0
    #allocation2 [shape = 'u8[4096]{0}', space=vmem, size = 0x1000, scoped, tag = 'output window, operand 0']
    #allocation3 [shape = 's32[2]{0}', space=sflag, size = 0x8, scoped, tag = 'scoped memory for tpu_custom_call.1']
    %8 = vsyncpa [#allocation3], 0
    %s9 = scalar_lea.sflag [#allocation3], 1
    %10 = vsyncpa %s9, 0
    loop: start=0, step=1, limit=4
    $region2: #{tpu_custom_call.1} parent=1 // loop_pre_header
      _
    $region3: #{tpu_custom_call.1} parent=1 // loop_header
      %s12 = sphi 0, %s16
      %p13 = scmp.ge.s32.totalorder %s12, 4
      %s22 = sphi 0, %s24
      %s25 = sphi 0, %s22
      %s26 = sphi 0, %s25
      %s42 = sphi 0, %s26
      %s46 = sphi 0, %s46
      %s48 = sphi 0, %s46
      %s49 = sphi 0, %s48
      %s63 = sphi 0, %s49
      %s67 = sphi 0, %s67
      %s69 = sphi 0, %s67
      %s70 = sphi 0, %s69
      %s84 = sphi 0, %s70
      %s90 = sphi 0, %s92
      %s93 = sphi 0, %s90
      %s94 = sphi 0, %s93
      %s110 = sphi 0, %s94
    $region4: #{tpu_custom_call.1} parent=1 // loop_header_branch
      %15 = sbr.rel (%p13) target = $region8
    $region5: #{tpu_custom_call.1} parent=1 // loop_body
      %s17 = ssub.s32 %s12, 1
      %s18 = ssub.s32 %s12, 2
      %s19 = sadd.s32 %s12, 1
      %s20 = ssub.s32 %s12, %s19
      %p21 = scmp.eq.s32.totalorder %s20, 0
      %s23 = sadd.s32 %s22, 1
      %s24 = scalar_select %p21, %s22, %s23
      %p27 = pneg %p21
      %p28 = scmp.eq.s32.totalorder %s12, 1
      %p29 = por %p27, %p28
      %p30 = scmp.ne.s32.totalorder %s22, %s25
      %p31 = scmp.eq.s32.totalorder %s12, 0
      %p32 = por %p30, %p31
      %p33 = scmp.ne.s32.totalorder %s22, %s25
      %p34 = scmp.eq.s32.totalorder %s17, 1
      %p35 = por %p33, %p34
      %p36 = scmp.ne.s32.totalorder %s25, %s26
      %p37 = scmp.eq.s32.totalorder %s17, 0
      %p38 = por %p36, %p37
      %p39 = scmp.ne.s32.totalorder %s25, %s26
      %p40 = scmp.eq.s32.totalorder %s18, 1
      %p41 = por %p39, %p40
      %p43 = scmp.ne.s32.totalorder %s26, %s42
      %p44 = scmp.eq.s32.totalorder %s18, 0
      %p45 = por %p43, %p44
      %s47 = sadd.s32 %s46, 1
      %p50 = scmp.eq.s32.totalorder %s12, 1
      %p51 = scmp.ne.s32.totalorder %s46, %s48
      %p52 = scmp.eq.s32.totalorder %s12, 0
      %p53 = por %p51, %p52
      %p54 = scmp.ne.s32.totalorder %s46, %s48
      %p55 = scmp.eq.s32.totalorder %s17, 1
      %p56 = por %p54, %p55
      %p57 = scmp.ne.s32.totalorder %s48, %s49
      %p58 = scmp.eq.s32.totalorder %s17, 0
      %p59 = por %p57, %p58
      %p60 = scmp.ne.s32.totalorder %s48, %s49
      %p61 = scmp.eq.s32.totalorder %s18, 1
      %p62 = por %p60, %p61
      %p64 = scmp.ne.s32.totalorder %s49, %s63
      %p65 = scmp.eq.s32.totalorder %s18, 0
      %p66 = por %p64, %p65
      %s68 = sadd.s32 %s67, 1
      %p71 = scmp.eq.s32.totalorder %s12, 1
      %p72 = scmp.ne.s32.totalorder %s67, %s69
      %p73 = scmp.eq.s32.totalorder %s12, 0
      %p74 = por %p72, %p73
      %p75 = scmp.ne.s32.totalorder %s67, %s69
      %p76 = scmp.eq.s32.totalorder %s17, 1
      %p77 = por %p75, %p76
      %p78 = scmp.ne.s32.totalorder %s69, %s70
      %p79 = scmp.eq.s32.totalorder %s17, 0
      %p80 = por %p78, %p79
      %p81 = scmp.ne.s32.totalorder %s69, %s70
      %p82 = scmp.eq.s32.totalorder %s18, 1
      %p83 = por %p81, %p82
      %p85 = scmp.ne.s32.totalorder %s70, %s84
      %p86 = scmp.eq.s32.totalorder %s18, 0
      %p87 = por %p85, %p86
      %s88 = ssub.s32 %s12, %s19
      %p89 = scmp.eq.s32.totalorder %s88, 0
      %s91 = sadd.s32 %s90, 1
      %s92 = scalar_select %p89, %s90, %s91
      %p95 = pneg %p89
      %p96 = scmp.eq.s32.totalorder %s12, 1
      %p97 = por %p95, %p96
      %p98 = scmp.ne.s32.totalorder %s90, %s93
      %p99 = scmp.eq.s32.totalorder %s12, 0
      %p100 = por %p98, %p99
      %p101 = scmp.ne.s32.totalorder %s90, %s93
      %p102 = scmp.eq.s32.totalorder %s17, 1
      %p103 = por %p101, %p102
      %p104 = scmp.ne.s32.totalorder %s93, %s94
      %p105 = scmp.eq.s32.totalorder %s17, 0
      %p106 = por %p104, %p105
      %p107 = scmp.ne.s32.totalorder %s93, %s94
      %p108 = scmp.eq.s32.totalorder %s18, 1
      %p109 = por %p107, %p108
      %p111 = scmp.ne.s32.totalorder %s94, %s110
      %p112 = scmp.eq.s32.totalorder %s18, 0
      %p113 = por %p111, %p112
      %p114 = scmp.le.s32.totalorder 1, %s12
      %p115 = scmp.lt.s32.totalorder %s12, 3
      %p116 = pnand %p114, %p115
      %p117 = pneg %p116
      // Predicated region
      $region9: #{tpu_custom_call.1} parent=5 // pred_check
        _
      $region10: #{tpu_custom_call.1} parent=5 // pred_check_branch
        %119 = sbr.rel (%p116) target = $region12
      $region11: #{tpu_custom_call.1} parent=5 // pred_region
        %s120 = ssub.s32 %s12, 1
        // Predicated region
        $region13: #{tpu_custom_call.1} parent=11 // pred_check
          %p121 = pneg %p59
        $region14: #{tpu_custom_call.1} parent=11 // pred_check_branch
          %123 = sbr.rel (%p121) target = $region16
        $region15: #{tpu_custom_call.1} parent=11 // pred_region
          _
        $region16: #{tpu_custom_call.1} parent=11 // pred_fallthru
          _
        // Predicated region
        $region17: #{tpu_custom_call.1} parent=11 // pred_check
          %p124 = pneg %p80
        $region18: #{tpu_custom_call.1} parent=11 // pred_check_branch
          %126 = sbr.rel (%p124) target = $region20
        $region19: #{tpu_custom_call.1} parent=11 // pred_region
          _
        $region20: #{tpu_custom_call.1} parent=11 // pred_fallthru
          _
      $region12: #{tpu_custom_call.1} parent=5 // pred_fallthru
        _
      %p127 = scmp.lt.s32.totalorder %s12, 2
      // Predicated region
      $region21: #{tpu_custom_call.1} parent=5 // pred_check
        %p128 = pneg %p127
      $region22: #{tpu_custom_call.1} parent=5 // pred_check_branch
        %130 = sbr.rel (%p128) target = $region24
      $region23: #{tpu_custom_call.1} parent=5 // pred_region
        // Predicated region
        $region25: #{tpu_custom_call.1} parent=23 // pred_check
          %p131 = pneg %p32
        $region26: #{tpu_custom_call.1} parent=23 // pred_check_branch
          %133 = sbr.rel (%p131) target = $region28
        $region27: #{tpu_custom_call.1} parent=23 // pred_region
          %p134 = scmp.lt.s32.totalorder %s12, 1
          %s135 = scalar_select %p134, %s12, 1
          %s136 = smul.addr %s135, 4
          %s137 = scalar_lea.vmem %s0, %s136
        $region28: #{tpu_custom_call.1} parent=23 // pred_fallthru
          _
      $region24: #{tpu_custom_call.1} parent=5 // pred_fallthru
        _
      %p138 = scmp.le.s32.totalorder 1, %s12
      %p139 = scmp.lt.s32.totalorder %s12, 3
      %p140 = pnand %p138, %p139
      %p141 = pneg %p140
      // Predicated region
      $region29: #{tpu_custom_call.1} parent=5 // pred_check
        _
      $region30: #{tpu_custom_call.1} parent=5 // pred_check_branch
        %143 = sbr.rel (%p140) target = $region32
      $region31: #{tpu_custom_call.1} parent=5 // pred_region
        %s144 = ssub.s32 %s12, 1
        %p145 = scmp.lt.s32.totalorder %s17, 1
        %s146 = scalar_select %p145, %s17, 1
        %s147 = smul.addr %s146, 4
        %s148 = scalar_lea.vmem %s0, %s147
        %p149 = pneg %p38
        %p150 = pneg %p35
        %p151 = pneg %p59
        %p152 = pneg %p56
        %p153 = pneg %p80
        %p154 = pneg %p77
        %p155 = pneg %p106
        %p156 = pneg %p103
        %s157 = sand.u32 %s93, 1
        %s158 = scalar_lea.sflag [#allocation3], %s157
        %s159 = sand.u32 %s93, 1
        %s160 = smul.addr %s159, 4
        %s161 = scalar_lea.vmem [#allocation2], %s160
        %p162 = scmp.lt.s32.totalorder %s17, 1
        %s163 = scalar_select %p162, %s17, 1
        %s164 = smul.addr %s163, 4
        %s165 = scalar_lea.vmem %s0, %s164
        %v167 = vld [vmem:[%s165] sm:$0x7]
        %v168 = vld [vmem:[%s1] sm:$0xf]
        %v170 = vunpack.c.l.b16 %v168
        %v171 = vpack.c.b16 %v170, %v170
        %172 = vrot.lane.b32.xlu0 %v171, 123
        %v173 = vpop.permute.xlu0 %172
        %v175 = vunpack.c.l.b16 %v167
        %v176 = vpack.c.b16 %v175, %v175
        %177 = vrot.lane.b32.xlu0 %v176, 127
        %v178 = vpop.permute.xlu0 %177
        %vm179 = vcmask 39936
        %v181 = vsel %vm179, %v173, 0
        %vm183 = vcmask 1041408
        %vm184 = vcmask 1042432
        %v185 = vsel %vm183, 4294967295, 65535
        %v186 = vsel %vm184, %v185, 0
        %v188 = vand.u32 %v178, %v186
        %190 = vmatprep.subr.bf16.mxu0 0
        %191 = vmatpush1.bf16.msra.mxu0 %v188
        %192 = vmatprep.subr.bf16.mxu0 0
        %193 = vmatpush1.bf16.msra.mxu0 0
        %194 = vmatprep.subr.bf16.mxu0 0
        %195 = vmatpush1.bf16.msra.mxu0 0
        %196 = vmatprep.subr.bf16.mxu0 0
        %197 = vmatpush1.bf16.msra.mxu0 0
        %198 = vmatprep.subr.bf16.mxu0 0
        %199 = vmatpush1.bf16.msra.mxu0 0
        %200 = vmatprep.subr.bf16.mxu0 0
        %201 = vmatpush1.bf16.msra.mxu0 0
        %202 = vmatprep.subr.bf16.mxu0 0
        %203 = vmatpush1.bf16.msra.mxu0 0
        %204 = vmatprep.subr.bf16.mxu0 0
        %205 = vmatpush1.bf16.msra.mxu0 0
        %206 = vmatprep.subr.bf16.mxu0 0
        %207 = vmatpush1.bf16.msra.mxu0 0
        %208 = vmatprep.subr.bf16.mxu0 0
        %209 = vmatpush1.bf16.msra.mxu0 0
        %210 = vmatprep.subr.bf16.mxu0 0
        %211 = vmatpush1.bf16.msra.mxu0 0
        %212 = vmatprep.subr.bf16.mxu0 0
        %213 = vmatpush1.bf16.msra.mxu0 0
        %214 = vmatprep.subr.bf16.mxu0 0
        %215 = vmatpush1.bf16.msra.mxu0 0
        %216 = vmatprep.subr.bf16.mxu0 0
        %217 = vmatpush1.bf16.msra.mxu0 0
        %218 = vmatprep.subr.bf16.mxu0 0
        %219 = vmatpush1.bf16.msra.mxu0 0
        %220 = vmatprep.subr.bf16.mxu0 0
        %221 = vmatpush1.bf16.msra.mxu0 0
        %222 = vmatprep.mubr.bf16.mxu0 0
        %223 = vmatmul.mubr.bf16.gmra.mrb[0].mxu0 %v181
        %v224 = vpop.f32.mrb[0].mxu0
        %v225 = vadd.f32 0.0, %v224
        %v226 = vpop.f32.mrb[0].mxu0
        %v227 = vpop.f32.mrb[0].mxu0
        %v228 = vpop.f32.mrb[0].mxu0
        %229 = vdwg.mxu0
        %v231 = vsel %vm179, %v168, 0
        %v234 = vand.u32 %v167, %v186
        %236 = vmatprep.subr.bf16.mxu0 0
        %237 = vmatpush1.bf16.msra.mxu0 %v234
        %238 = vmatprep.subr.bf16.mxu0 0
        %239 = vmatpush1.bf16.msra.mxu0 0
        %240 = vmatprep.subr.bf16.mxu0 0
        %241 = vmatpush1.bf16.msra.mxu0 0
        %242 = vmatprep.subr.bf16.mxu0 0
        %243 = vmatpush1.bf16.msra.mxu0 0
        %244 = vmatprep.subr.bf16.mxu0 0
        %245 = vmatpush1.bf16.msra.mxu0 0
        %246 = vmatprep.subr.bf16.mxu0 0
        %247 = vmatpush1.bf16.msra.mxu0 0
        %248 = vmatprep.subr.bf16.mxu0 0
        %249 = vmatpush1.bf16.msra.mxu0 0
        %250 = vmatprep.subr.bf16.mxu0 0
        %251 = vmatpush1.bf16.msra.mxu0 0
        %252 = vmatprep.subr.bf16.mxu0 0
        %253 = vmatpush1.bf16.msra.mxu0 0
        %254 = vmatprep.subr.bf16.mxu0 0
        %255 = vmatpush1.bf16.msra.mxu0 0
        %256 = vmatprep.subr.bf16.mxu0 0
        %257 = vmatpush1.bf16.msra.mxu0 0
        %258 = vmatprep.subr.bf16.mxu0 0
        %259 = vmatpush1.bf16.msra.mxu0 0
        %260 = vmatprep.subr.bf16.mxu0 0
        %261 = vmatpush1.bf16.msra.mxu0 0
        %262 = vmatprep.subr.bf16.mxu0 0
        %263 = vmatpush1.bf16.msra.mxu0 0
        %264 = vmatprep.subr.bf16.mxu0 0
        %265 = vmatpush1.bf16.msra.mxu0 0
        %266 = vmatprep.subr.bf16.mxu0 0
        %267 = vmatpush1.bf16.msra.mxu0 0
        %268 = vmatprep.mubr.bf16.mxu0 0
        %269 = vmatmul.mubr.bf16.gmra.mrb[0].mxu0 %v231
        %v270 = vpop.f32.mrb[0].mxu0
        %v271 = vadd.f32 %v225, %v270
        %v272 = vpop.f32.mrb[0].mxu0
        %v273 = vpop.f32.mrb[0].mxu0
        %v274 = vpop.f32.mrb[0].mxu0
        %275 = vdwg.mxu0
        %276 = vrot.lane.b32.xlu0 %v171, 118
        %v277 = vpop.permute.xlu0 %276
        %278 = vrot.lane.b32.xlu0 %v176, 126
        %v279 = vpop.permute.xlu0 %278
        %v281 = vsel %vm179, %v277, 0
        %v284 = vand.u32 %v279, %v186
        %286 = vmatprep.subr.bf16.mxu0 0
        %287 = vmatpush1.bf16.msra.mxu0 %v284
        %288 = vmatprep.subr.bf16.mxu0 0
        %289 = vmatpush1.bf16.msra.mxu0 0
        %290 = vmatprep.subr.bf16.mxu0 0
        %291 = vmatpush1.bf16.msra.mxu0 0
        %292 = vmatprep.subr.bf16.mxu0 0
        %293 = vmatpush1.bf16.msra.mxu0 0
        %294 = vmatprep.subr.bf16.mxu0 0
        %295 = vmatpush1.bf16.msra.mxu0 0
        %296 = vmatprep.subr.bf16.mxu0 0
        %297 = vmatpush1.bf16.msra.mxu0 0
        %298 = vmatprep.subr.bf16.mxu0 0
        %299 = vmatpush1.bf16.msra.mxu0 0
        %300 = vmatprep.subr.bf16.mxu0 0
        %301 = vmatpush1.bf16.msra.mxu0 0
        %302 = vmatprep.subr.bf16.mxu0 0
        %303 = vmatpush1.bf16.msra.mxu0 0
        %304 = vmatprep.subr.bf16.mxu0 0
        %305 = vmatpush1.bf16.msra.mxu0 0
        %306 = vmatprep.subr.bf16.mxu0 0
        %307 = vmatpush1.bf16.msra.mxu0 0
        %308 = vmatprep.subr.bf16.mxu0 0
        %309 = vmatpush1.bf16.msra.mxu0 0
        %310 = vmatprep.subr.bf16.mxu0 0
        %311 = vmatpush1.bf16.msra.mxu0 0
        %312 = vmatprep.subr.bf16.mxu0 0
        %313 = vmatpush1.bf16.msra.mxu0 0
        %314 = vmatprep.subr.bf16.mxu0 0
        %315 = vmatpush1.bf16.msra.mxu0 0
        %316 = vmatprep.subr.bf16.mxu0 0
        %317 = vmatpush1.bf16.msra.mxu0 0
        %318 = vmatprep.mubr.bf16.mxu0 0
        %319 = vmatmul.mubr.bf16.gmra.mrb[0].mxu0 %v281
        %v320 = vpop.f32.mrb[0].mxu0
        %v321 = vadd.f32 0.0, %v320
        %v322 = vpop.f32.mrb[0].mxu0
        %v323 = vpop.f32.mrb[0].mxu0
        %v324 = vpop.f32.mrb[0].mxu0
        %325 = vdwg.mxu0
        %v326 = vadd.f32 %v271, %v321
        %327 = vrot.lane.b32.xlu0 %v171, 113
        %v328 = vpop.permute.xlu0 %327
        %329 = vrot.lane.b32.xlu0 %v176, 118
        %v330 = vpop.permute.xlu0 %329
        %v332 = vsel %vm179, %v328, 0
        %v335 = vand.u32 %v330, %v186
        %337 = vmatprep.subr.bf16.mxu0 0
        %338 = vmatpush1.bf16.msra.mxu0 %v335
        %339 = vmatprep.subr.bf16.mxu0 0
        %340 = vmatpush1.bf16.msra.mxu0 0
        %341 = vmatprep.subr.bf16.mxu0 0
        %342 = vmatpush1.bf16.msra.mxu0 0
        %343 = vmatprep.subr.bf16.mxu0 0
        %344 = vmatpush1.bf16.msra.mxu0 0
        %345 = vmatprep.subr.bf16.mxu0 0
        %346 = vmatpush1.bf16.msra.mxu0 0
        %347 = vmatprep.subr.bf16.mxu0 0
        %348 = vmatpush1.bf16.msra.mxu0 0
        %349 = vmatprep.subr.bf16.mxu0 0
        %350 = vmatpush1.bf16.msra.mxu0 0
        %351 = vmatprep.subr.bf16.mxu0 0
        %352 = vmatpush1.bf16.msra.mxu0 0
        %353 = vmatprep.subr.bf16.mxu0 0
        %354 = vmatpush1.bf16.msra.mxu0 0
        %355 = vmatprep.subr.bf16.mxu0 0
        %356 = vmatpush1.bf16.msra.mxu0 0
        %357 = vmatprep.subr.bf16.mxu0 0
        %358 = vmatpush1.bf16.msra.mxu0 0
        %359 = vmatprep.subr.bf16.mxu0 0
        %360 = vmatpush1.bf16.msra.mxu0 0
        %361 = vmatprep.subr.bf16.mxu0 0
        %362 = vmatpush1.bf16.msra.mxu0 0
        %363 = vmatprep.subr.bf16.mxu0 0
        %364 = vmatpush1.bf16.msra.mxu0 0
        %365 = vmatprep.subr.bf16.mxu0 0
        %366 = vmatpush1.bf16.msra.mxu0 0
        %367 = vmatprep.subr.bf16.mxu0 0
        %368 = vmatpush1.bf16.msra.mxu0 0
        %369 = vmatprep.mubr.bf16.mxu0 0
        %370 = vmatmul.mubr.bf16.gmra.mrb[0].mxu0 %v332
        %v371 = vpop.f32.mrb[0].mxu0
        %v372 = vadd.f32 0.0, %v371
        %v373 = vpop.f32.mrb[0].mxu0
        %v374 = vpop.f32.mrb[0].mxu0
        %v375 = vpop.f32.mrb[0].mxu0
        %376 = vdwg.mxu0
        %v377 = vadd.f32 %v326, %v372
        %378 = vrot.lane.b32.xlu0 %v171, 108
        %v379 = vpop.permute.xlu0 %378
        %380 = vrot.lane.b32.xlu0 %v176, 117
        %v381 = vpop.permute.xlu0 %380
        %v383 = vsel %vm179, %v379, 0
        %v386 = vand.u32 %v381, %v186
        %388 = vmatprep.subr.bf16.mxu0 0
        %389 = vmatpush1.bf16.msra.mxu0 %v386
        %390 = vmatprep.subr.bf16.mxu0 0
        %391 = vmatpush1.bf16.msra.mxu0 0
        %392 = vmatprep.subr.bf16.mxu0 0
        %393 = vmatpush1.bf16.msra.mxu0 0
        %394 = vmatprep.subr.bf16.mxu0 0
        %395 = vmatpush1.bf16.msra.mxu0 0
        %396 = vmatprep.subr.bf16.mxu0 0
        %397 = vmatpush1.bf16.msra.mxu0 0
        %398 = vmatprep.subr.bf16.mxu0 0
        %399 = vmatpush1.bf16.msra.mxu0 0
        %400 = vmatprep.subr.bf16.mxu0 0
        %401 = vmatpush1.bf16.msra.mxu0 0
        %402 = vmatprep.subr.bf16.mxu0 0
        %403 = vmatpush1.bf16.msra.mxu0 0
        %404 = vmatprep.subr.bf16.mxu0 0
        %405 = vmatpush1.bf16.msra.mxu0 0
        %406 = vmatprep.subr.bf16.mxu0 0
        %407 = vmatpush1.bf16.msra.mxu0 0
        %408 = vmatprep.subr.bf16.mxu0 0
        %409 = vmatpush1.bf16.msra.mxu0 0
        %410 = vmatprep.subr.bf16.mxu0 0
        %411 = vmatpush1.bf16.msra.mxu0 0
        %412 = vmatprep.subr.bf16.mxu0 0
        %413 = vmatpush1.bf16.msra.mxu0 0
        %414 = vmatprep.subr.bf16.mxu0 0
        %415 = vmatpush1.bf16.msra.mxu0 0
        %416 = vmatprep.subr.bf16.mxu0 0
        %417 = vmatpush1.bf16.msra.mxu0 0
        %418 = vmatprep.subr.bf16.mxu0 0
        %419 = vmatpush1.bf16.msra.mxu0 0
        %420 = vmatprep.mubr.bf16.mxu0 0
        %421 = vmatmul.mubr.bf16.gmra.mrb[0].mxu0 %v383
        %v422 = vpop.f32.mrb[0].mxu0
        %v423 = vadd.f32 0.0, %v422
        %v424 = vpop.f32.mrb[0].mxu0
        %v425 = vpop.f32.mrb[0].mxu0
        %v426 = vpop.f32.mrb[0].mxu0
        %427 = vdwg.mxu0
        %v428 = vadd.f32 %v377, %v423
        %429 = vrot.lane.b32.xlu0 %v171, 103
        %v430 = vpop.permute.xlu0 %429
        %431 = vrot.lane.b32.xlu0 %v176, 116
        %v432 = vpop.permute.xlu0 %431
        %v434 = vsel %vm179, %v430, 0
        %v437 = vand.u32 %v432, %v186
        %439 = vmatprep.subr.bf16.mxu0 0
        %440 = vmatpush1.bf16.msra.mxu0 %v437
        %441 = vmatprep.subr.bf16.mxu0 0
        %442 = vmatpush1.bf16.msra.mxu0 0
        %443 = vmatprep.subr.bf16.mxu0 0
        %444 = vmatpush1.bf16.msra.mxu0 0
        %445 = vmatprep.subr.bf16.mxu0 0
        %446 = vmatpush1.bf16.msra.mxu0 0
        %447 = vmatprep.subr.bf16.mxu0 0
        %448 = vmatpush1.bf16.msra.mxu0 0
        %449 = vmatprep.subr.bf16.mxu0 0
        %450 = vmatpush1.bf16.msra.mxu0 0
        %451 = vmatprep.subr.bf16.mxu0 0
        %452 = vmatpush1.bf16.msra.mxu0 0
        %453 = vmatprep.subr.bf16.mxu0 0
        %454 = vmatpush1.bf16.msra.mxu0 0
        %455 = vmatprep.subr.bf16.mxu0 0
        %456 = vmatpush1.bf16.msra.mxu0 0
        %457 = vmatprep.subr.bf16.mxu0 0
        %458 = vmatpush1.bf16.msra.mxu0 0
        %459 = vmatprep.subr.bf16.mxu0 0
        %460 = vmatpush1.bf16.msra.mxu0 0
        %461 = vmatprep.subr.bf16.mxu0 0
        %462 = vmatpush1.bf16.msra.mxu0 0
        %463 = vmatprep.subr.bf16.mxu0 0
        %464 = vmatpush1.bf16.msra.mxu0 0
        %465 = vmatprep.subr.bf16.mxu0 0
        %466 = vmatpush1.bf16.msra.mxu0 0
        %467 = vmatprep.subr.bf16.mxu0 0
        %468 = vmatpush1.bf16.msra.mxu0 0
        %469 = vmatprep.subr.bf16.mxu0 0
        %470 = vmatpush1.bf16.msra.mxu0 0
        %471 = vmatprep.mubr.bf16.mxu0 0
        %472 = vmatmul.mubr.bf16.gmra.mrb[0].mxu0 %v434
        %v473 = vpop.f32.mrb[0].mxu0
        %v474 = vadd.f32 0.0, %v473
        %v475 = vpop.f32.mrb[0].mxu0
        %v476 = vpop.f32.mrb[0].mxu0
        %v477 = vpop.f32.mrb[0].mxu0
        %478 = vdwg.mxu0
        %v479 = vadd.f32 %v428, %v474
        %480 = vrot.lane.b32.xlu0 %v171, 98
        %v481 = vpop.permute.xlu0 %480
        %482 = vrot.lane.b32.xlu0 %v176, 108
        %v483 = vpop.permute.xlu0 %482
        %v485 = vsel %vm179, %v481, 0
        %v488 = vand.u32 %v483, %v186
        %490 = vmatprep.subr.bf16.mxu0 0
        %491 = vmatpush1.bf16.msra.mxu0 %v488
        %492 = vmatprep.subr.bf16.mxu0 0
        %493 = vmatpush1.bf16.msra.mxu0 0
        %494 = vmatprep.subr.bf16.mxu0 0
        %495 = vmatpush1.bf16.msra.mxu0 0
        %496 = vmatprep.subr.bf16.mxu0 0
        %497 = vmatpush1.bf16.msra.mxu0 0
        %498 = vmatprep.subr.bf16.mxu0 0
        %499 = vmatpush1.bf16.msra.mxu0 0
        %500 = vmatprep.subr.bf16.mxu0 0
        %501 = vmatpush1.bf16.msra.mxu0 0
        %502 = vmatprep.subr.bf16.mxu0 0
        %503 = vmatpush1.bf16.msra.mxu0 0
        %504 = vmatprep.subr.bf16.mxu0 0
        %505 = vmatpush1.bf16.msra.mxu0 0
        %506 = vmatprep.subr.bf16.mxu0 0
        %507 = vmatpush1.bf16.msra.mxu0 0
        %508 = vmatprep.subr.bf16.mxu0 0
        %509 = vmatpush1.bf16.msra.mxu0 0
        %510 = vmatprep.subr.bf16.mxu0 0
        %511 = vmatpush1.bf16.msra.mxu0 0
        %512 = vmatprep.subr.bf16.mxu0 0
        %513 = vmatpush1.bf16.msra.mxu0 0
        %514 = vmatprep.subr.bf16.mxu0 0
        %515 = vmatpush1.bf16.msra.mxu0 0
        %516 = vmatprep.subr.bf16.mxu0 0
        %517 = vmatpush1.bf16.msra.mxu0 0
        %518 = vmatprep.subr.bf16.mxu0 0
        %519 = vmatpush1.bf16.msra.mxu0 0
        %520 = vmatprep.subr.bf16.mxu0 0
        %521 = vmatpush1.bf16.msra.mxu0 0
        %522 = vmatprep.mubr.bf16.mxu0 0
        %523 = vmatmul.mubr.bf16.gmra.mrb[0].mxu0 %v485
        %v524 = vpop.f32.mrb[0].mxu0
        %v525 = vadd.f32 0.0, %v524
        %v526 = vpop.f32.mrb[0].mxu0
        %v527 = vpop.f32.mrb[0].mxu0
        %v528 = vpop.f32.mrb[0].mxu0
        %529 = vdwg.mxu0
        %v530 = vadd.f32 %v479, %v525
        %531 = vrot.lane.b32.xlu0 %v171, 93
        %v532 = vpop.permute.xlu0 %531
        %533 = vrot.lane.b32.xlu0 %v176, 107
        %v534 = vpop.permute.xlu0 %533
        %v536 = vsel %vm179, %v532, 0
        %v539 = vand.u32 %v534, %v186
        %541 = vmatprep.subr.bf16.mxu0 0
        %542 = vmatpush1.bf16.msra.mxu0 %v539
        %543 = vmatprep.subr.bf16.mxu0 0
        %544 = vmatpush1.bf16.msra.mxu0 0
        %545 = vmatprep.subr.bf16.mxu0 0
        %546 = vmatpush1.bf16.msra.mxu0 0
        %547 = vmatprep.subr.bf16.mxu0 0
        %548 = vmatpush1.bf16.msra.mxu0 0
        %549 = vmatprep.subr.bf16.mxu0 0
        %550 = vmatpush1.bf16.msra.mxu0 0
        %551 = vmatprep.subr.bf16.mxu0 0
        %552 = vmatpush1.bf16.msra.mxu0 0
        %553 = vmatprep.subr.bf16.mxu0 0
        %554 = vmatpush1.bf16.msra.mxu0 0
        %555 = vmatprep.subr.bf16.mxu0 0
        %556 = vmatpush1.bf16.msra.mxu0 0
        %557 = vmatprep.subr.bf16.mxu0 0
        %558 = vmatpush1.bf16.msra.mxu0 0
        %559 = vmatprep.subr.bf16.mxu0 0
        %560 = vmatpush1.bf16.msra.mxu0 0
        %561 = vmatprep.subr.bf16.mxu0 0
        %562 = vmatpush1.bf16.msra.mxu0 0
        %563 = vmatprep.subr.bf16.mxu0 0
        %564 = vmatpush1.bf16.msra.mxu0 0
        %565 = vmatprep.subr.bf16.mxu0 0
        %566 = vmatpush1.bf16.msra.mxu0 0
        %567 = vmatprep.subr.bf16.mxu0 0
        %568 = vmatpush1.bf16.msra.mxu0 0
        %569 = vmatprep.subr.bf16.mxu0 0
        %570 = vmatpush1.bf16.msra.mxu0 0
        %571 = vmatprep.subr.bf16.mxu0 0
        %572 = vmatpush1.bf16.msra.mxu0 0
        %573 = vmatprep.mubr.bf16.mxu0 0
        %574 = vmatmul.mubr.bf16.gmra.mrb[0].mxu0 %v536
        %v575 = vpop.f32.mrb[0].mxu0
        %v576 = vadd.f32 0.0, %v575
        %v577 = vpop.f32.mrb[0].mxu0
        %v578 = vpop.f32.mrb[0].mxu0
        %v579 = vpop.f32.mrb[0].mxu0
        %580 = vdwg.mxu0
        %v581 = vadd.f32 %v530, %v576
        %582 = vrot.lane.b32.xlu0 %v171, 88
        %v583 = vpop.permute.xlu0 %582
        %584 = vrot.lane.b32.xlu0 %v176, 106
        %v585 = vpop.permute.xlu0 %584
        %v587 = vsel %vm179, %v583, 0
        %v590 = vand.u32 %v585, %v186
        %592 = vmatprep.subr.bf16.mxu0 0
        %593 = vmatpush1.bf16.msra.mxu0 %v590
        %594 = vmatprep.subr.bf16.mxu0 0
        %595 = vmatpush1.bf16.msra.mxu0 0
        %596 = vmatprep.subr.bf16.mxu0 0
        %597 = vmatpush1.bf16.msra.mxu0 0
        %598 = vmatprep.subr.bf16.mxu0 0
        %599 = vmatpush1.bf16.msra.mxu0 0
        %600 = vmatprep.subr.bf16.mxu0 0
        %601 = vmatpush1.bf16.msra.mxu0 0
        %602 = vmatprep.subr.bf16.mxu0 0
        %603 = vmatpush1.bf16.msra.mxu0 0
        %604 = vmatprep.subr.bf16.mxu0 0
        %605 = vmatpush1.bf16.msra.mxu0 0
        %606 = vmatprep.subr.bf16.mxu0 0
        %607 = vmatpush1.bf16.msra.mxu0 0
        %608 = vmatprep.subr.bf16.mxu0 0
        %609 = vmatpush1.bf16.msra.mxu0 0
        %610 = vmatprep.subr.bf16.mxu0 0
        %611 = vmatpush1.bf16.msra.mxu0 0
        %612 = vmatprep.subr.bf16.mxu0 0
        %613 = vmatpush1.bf16.msra.mxu0 0
        %614 = vmatprep.subr.bf16.mxu0 0
        %615 = vmatpush1.bf16.msra.mxu0 0
        %616 = vmatprep.subr.bf16.mxu0 0
        %617 = vmatpush1.bf16.msra.mxu0 0
        %618 = vmatprep.subr.bf16.mxu0 0
        %619 = vmatpush1.bf16.msra.mxu0 0
        %620 = vmatprep.subr.bf16.mxu0 0
        %621 = vmatpush1.bf16.msra.mxu0 0
        %622 = vmatprep.subr.bf16.mxu0 0
        %623 = vmatpush1.bf16.msra.mxu0 0
        %624 = vmatprep.mubr.bf16.mxu0 0
        %625 = vmatmul.mubr.bf16.gmra.mrb[0].mxu0 %v587
        %v626 = vpop.f32.mrb[0].mxu0
        %v627 = vadd.f32 0.0, %v626
        %v628 = vpop.f32.mrb[0].mxu0
        %v629 = vpop.f32.mrb[0].mxu0
        %v630 = vpop.f32.mrb[0].mxu0
        %631 = vdwg.mxu0
        %v632 = vadd.f32 %v581, %v627
        %v633 = vld [vmem:[%s2] sm:$0xff]
        %635 = vset.pattern.permute.xlu0 0
        %636 = vperm.xlu0 %635, %v633
        %v637 = vpop.permute.xlu0 %636
        %v639 = vadd.f32 %v632, %v637
        %v640 = vmax.f32 %v639, 0.0
        %v641 = vpack.c.bf16 %v640, %v640
        %vm642 = vcmask 814080
        %643 = vst.msk [vmem:[%s161] sm:$0xf] %vm642, %v641
        %s644 = sand.u32 %s93, 1
        %s645 = scalar_lea.sflag [#allocation3], %s644
        %s646 = sand.u32 %s93, 1
        %s647 = smul.addr %s646, 4
        %s648 = scalar_lea.vmem [#allocation2], %s647
        // Predicated region
        $region33: #{tpu_custom_call.1} parent=31 // pred_check
          %p649 = pneg %p103
        $region34: #{tpu_custom_call.1} parent=31 // pred_check_branch
          %651 = sbr.rel (%p649) target = $region36
        $region35: #{tpu_custom_call.1} parent=31 // pred_region
          %s653 = ssub.s32 64, 64
          %654 = vsyncadd %s645, %s653
          %s655 = smul.addr %s17, 64
          %s656 = scalar_lea.hbm %s3, %s655
          %s658 = sshll.u32 %s648, 4
          %s659 = int_to_ptr.vmem [resolvable:$true] %s658
          %661 = dma.vmem_to_hbm [thread:$0]  %s659, 64, %s656, %s645
        $region36: #{tpu_custom_call.1} parent=31 // pred_fallthru
          _
      $region32: #{tpu_custom_call.1} parent=5 // pred_fallthru
        _
      %p662 = scmp.le.s32.totalorder 2, %s12
      // Predicated region
      $region37: #{tpu_custom_call.1} parent=5 // pred_check
        %p663 = pneg %p662
      $region38: #{tpu_custom_call.1} parent=5 // pred_check_branch
        %665 = sbr.rel (%p663) target = $region40
      $region39: #{tpu_custom_call.1} parent=5 // pred_region
        %s666 = ssub.s32 %s12, 2
        // Predicated region
        $region41: #{tpu_custom_call.1} parent=39 // pred_check
          %p667 = pneg %p109
        $region42: #{tpu_custom_call.1} parent=39 // pred_check_branch
          %669 = sbr.rel (%p667) target = $region44
        $region43: #{tpu_custom_call.1} parent=39 // pred_region
          %s670 = sand.u32 %s94, 1
          %s671 = scalar_lea.sflag [#allocation3], %s670
          %s672 = sand.u32 %s94, 1
          %s673 = smul.addr %s672, 4
          %s674 = scalar_lea.vmem [#allocation2], %s673
          %675 = dma.done %s671, 64
        $region44: #{tpu_custom_call.1} parent=39 // pred_fallthru
          _
      $region40: #{tpu_custom_call.1} parent=5 // pred_fallthru
        _
    $region6: #{tpu_custom_call.1} parent=1 // loop_footer
      %s16 = sadd.s32 1, %s12
    $region7: #{tpu_custom_call.1} parent=1 // loop_footer_branch
      %11 = sbr.rel target = $region3
    $region8: #{tpu_custom_call.1} parent=1 // loop_exit
      _
    %676 = vsyncpa [#allocation3], 1
    %s677 = scalar_lea.sflag [#allocation3], 1
    %678 = vsyncpa %s677, 1

</llo_original>
